<compile_context>
chip_gen: v5e
topology: v5e:2x2
jax: 0.10.0
libtpu: 0.0.40
codegen_flags: <defaults>
</compile_context>

<pallas_src>
import functools

import jax
import jax.numpy as jnp
from jax.experimental import pallas as pl
from jax.experimental.pallas import tpu as pltpu


def _berrar_kernel(params_ref, home_ref, aatt_ref, out_ref):
    # params (SMEM f32[6]): [alpha_h, beta_h, bias_h, alpha_a, beta_a, bias_a]
    # alpha / (1 + exp(-(beta*s + bias))) == 0.5*alpha * (tanh(0.5*(beta*s + bias)) + 1)
    # -> one EUP transcendental per element, no divide.  Scalar halving is free.
    half_ah = 0.5 * params_ref[0]
    half_bh = 0.5 * params_ref[1]
    half_yh = 0.5 * params_ref[2]
    half_aa = 0.5 * params_ref[3]
    half_ba = 0.5 * params_ref[4]
    half_ya = 0.5 * params_ref[5]

    hatt = home_ref[0]          # (R, TL)
    hdef = home_ref[1]          # (R, TL)
    aatt = aatt_ref[0]          # (R, TL); reference: adef == aatt == away[:half]

    # Direct half-slab stores — no in-kernel concatenate, no sublane shuffle.
    out_ref[0] = half_aa * (jnp.tanh(half_ba * (aatt + hdef) + half_ya) + 1.0)
    out_ref[1] = half_ah * (jnp.tanh(half_bh * (hatt + aatt) + half_yh) + 1.0)


def _choose_tile_lanes(lanes: int, rows: int,
                       budget_bytes: int = 8 << 20,
                       min_tile: int = 512,
                       max_tile: int = 8192) -> int:
    """Lane-axis tile: lane-dense (multiple of 128), >=512 wide, VMEM-budgeted,
    and splitting into >=2 grid steps when the extent is large (v7x has 2 TCs)."""
    if lanes % 128 != 0 or lanes <= 2 * min_tile:
        return lanes                              # full-extent block: always legal
    rows_pad = ((max(rows, 1) + 7) // 8) * 8      # sublane padding in VMEM
    # Live f32 rows per lane per pipeline slot: home(2R) + away_att(R) + out(2R),
    # double-buffered by the Pallas pipeline.
    bytes_per_lane = 2 * (5 * rows_pad) * 4
    vmem_cap = max(128, (budget_bytes // bytes_per_lane) // 128 * 128)
    half_lanes = (lanes // 2) // 128 * 128        # guarantees >=2 grid steps
    return max(128, min(vmem_cap, max_tile, half_lanes))


@functools.partial(jax.jit, static_argnames=("tile_lanes",))
def berrar_forward(home, away, params, *, tile_lanes=None):
    """home, away: (C, N) f32; params: (6,) f32. Returns (C, N) f32."""
    C, N = home.shape
    assert away.shape == (C, N) and C % 2 == 0 and C > 0
    half = C // 2
    total = half * N

    # Sublane-dense repacking: each half-plane becomes a full (8, L) slab when
    # possible (row-major reshape only — no data movement in XLA).
    if total % (8 * 128) == 0:
        rows, lanes = 8, total // 8
    else:
        rows, lanes = half, N                     # fallback: original layout

    tl = tile_lanes if tile_lanes is not None else _choose_tile_lanes(lanes, rows)
    grid = (pl.cdiv(lanes, tl),)

    home3 = home.reshape(2, rows, lanes)          # [hatt ; hdef]
    away3 = away.reshape(2, rows, lanes)          # only [0] (= away[:half]) is read

    flops = 5 * C * N
    transcendentals = C * N
    bytes_accessed = 4 * (C * N + half * N + C * N)   # home + away[:half] + out

    out3 = pl.pallas_call(
        _berrar_kernel,
        out_shape=jax.ShapeDtypeStruct((2, rows, lanes), home.dtype),
        grid=grid,
        in_specs=[
            pl.BlockSpec(memory_space=pltpu.MemorySpace.SMEM),      # 6 scalar params
            pl.BlockSpec((2, rows, tl), lambda j: (0, 0, j)),       # hatt & hdef
            pl.BlockSpec((1, rows, tl), lambda j: (0, 0, j)),       # away[:half] only
        ],
        out_specs=pl.BlockSpec((2, rows, tl), lambda j: (0, 0, j)),
        compiler_params=pltpu.CompilerParams(
            dimension_semantics=("parallel",),    # shard lane tiles across TCs (v7x)
            vmem_limit_bytes=32 * 1024 * 1024,
        ),
        cost_estimate=pl.CostEstimate(
            flops=flops,
            transcendentals=transcendentals,
            bytes_accessed=bytes_accessed,
        ),
    )(params, home3, away3)

    # (2, rows, lanes) -> (C, N) is the row-major equivalent of
    # concat([ghat_a, ghat_h], axis=0).
    return out3.reshape(C, N)


def _reference(home, away, params):
    ah, bh, yh, aa, ba, ya = (params[i] for i in range(6))
    half = home.shape[0] // 2
    hatt, hdef = home[:half], home[half:]
    aatt, adef = away[:half], away[:half]         # matches the PyTorch reference exactly
    ghat_h = ah / (1.0 + jnp.exp(-bh * (hatt + adef) - yh))
    ghat_a = aa / (1.0 + jnp.exp(-ba * (aatt + hdef) - ya))
    return jnp.concatenate([ghat_a, ghat_h], axis=0)


if __name__ == "__main__":
    # Module defaults: alpha_h, beta_h, bias_h, alpha_a, beta_a, bias_a
    params = jnp.array([80.0, 2.0, 0.0, 80.0, 2.0, 0.0], dtype=jnp.float32)

    key = jax.random.PRNGKey(0)
    ks = jax.random.split(key, 6)
    TOL = dict(rtol=1e-4, atol=1e-4)

    # Case 1: module-default in_channels=2, small N -> fallback (2, half, N) layout.
    h1 = jax.random.normal(ks[0], (2, 256), dtype=jnp.float32)
    a1 = jax.random.normal(ks[1], (2, 256), dtype=jnp.float32)
    o1 = jax.block_until_ready(berrar_forward(h1, a1, params))
    assert o1.shape == (2, 256)
    assert jnp.allclose(o1, _reference(h1, a1, params), **TOL)

    # Case 2: sublane-dense packed path (half*N % 1024 == 0), single block.
    h2 = jax.random.normal(ks[2], (4, 2048), dtype=jnp.float32)
    a2 = jax.random.normal(ks[3], (4, 2048), dtype=jnp.float32)
    o2 = jax.block_until_ready(berrar_forward(h2, a2, params))
    assert o2.shape == (4, 2048)
    assert jnp.allclose(o2, _reference(h2, a2, params), **TOL)

    # Case 3: packed path with a multi-step grid (exercises the pipeline; >=2 steps).
    h3 = jax.random.normal(ks[4], (4, 8192), dtype=jnp.float32)
    a3 = jax.random.normal(ks[5], (4, 8192), dtype=jnp.float32)
    o3 = jax.block_until_ready(berrar_forward(h3, a3, params))
    assert o3.shape == (4, 8192)
    assert jnp.allclose(o3, _reference(h3, a3, params), **TOL)

    print("KERNEL_OK")
</pallas_src>

<mosaic_0001>
module attributes {stable_mosaic.version = 11 : i64} {
  func.func @_berrar_kernel(%arg0: i32, %arg1: memref<6xf32, #tpu.memory_space<smem>>, %arg2: memref<2x1x256xf32, #tpu.memory_space<vmem>>, %arg3: memref<1x1x256xf32, #tpu.memory_space<vmem>>, %arg4: memref<2x1x256xf32, #tpu.memory_space<vmem>>) attributes {dimension_semantics = [#tpu.dimension_semantics<parallel>], iteration_bounds = array<i64: 1>, scalar_prefetch = 0 : i64, scratch_operands = 0 : i64, tpu.core_type = #tpu.core_type<tc>, window_params = [{transform_indices = @transform_0, window_bounds = array<i64: 6>}, {transform_indices = @transform_1, window_bounds = array<i64: 2, 1, 256>}, {transform_indices = @transform_2, window_bounds = array<i64: 1, 1, 256>}, {transform_indices = @transform_3, window_bounds = array<i64: 2, 1, 256>}]} {
    %c0 = arith.constant 0 : index
    %0 = memref.load %arg1[%c0] : memref<6xf32, #tpu.memory_space<smem>>
    %cst = arith.constant 5.000000e-01 : f32
    %1 = arith.mulf %cst, %0 : f32
    %c1 = arith.constant 1 : index
    %2 = memref.load %arg1[%c1] : memref<6xf32, #tpu.memory_space<smem>>
    %cst_0 = arith.constant 5.000000e-01 : f32
    %3 = arith.mulf %cst_0, %2 : f32
    %c2 = arith.constant 2 : index
    %4 = memref.load %arg1[%c2] : memref<6xf32, #tpu.memory_space<smem>>
    %cst_1 = arith.constant 5.000000e-01 : f32
    %5 = arith.mulf %cst_1, %4 : f32
    %c3 = arith.constant 3 : index
    %6 = memref.load %arg1[%c3] : memref<6xf32, #tpu.memory_space<smem>>
    %cst_2 = arith.constant 5.000000e-01 : f32
    %7 = arith.mulf %cst_2, %6 : f32
    %c4 = arith.constant 4 : index
    %8 = memref.load %arg1[%c4] : memref<6xf32, #tpu.memory_space<smem>>
    %cst_3 = arith.constant 5.000000e-01 : f32
    %9 = arith.mulf %cst_3, %8 : f32
    %c5 = arith.constant 5 : index
    %10 = memref.load %arg1[%c5] : memref<6xf32, #tpu.memory_space<smem>>
    %cst_4 = arith.constant 5.000000e-01 : f32
    %11 = arith.mulf %cst_4, %10 : f32
    %c0_5 = arith.constant 0 : index
    %c0_6 = arith.constant 0 : index
    %c0_7 = arith.constant 0 : index
    %12 = vector.load %arg2[%c0_5, %c0_6, %c0_7] : memref<2x1x256xf32, #tpu.memory_space<vmem>>, vector<1x1x256xf32>
    %13 = vector.shape_cast %12 : vector<1x1x256xf32> to vector<1x256xf32>
    %c1_8 = arith.constant 1 : index
    %c0_9 = arith.constant 0 : index
    %c0_10 = arith.constant 0 : index
    %14 = vector.load %arg2[%c1_8, %c0_9, %c0_10] : memref<2x1x256xf32, #tpu.memory_space<vmem>>, vector<1x1x256xf32>
    %15 = vector.shape_cast %14 : vector<1x1x256xf32> to vector<1x256xf32>
    %c0_11 = arith.constant 0 : index
    %c0_12 = arith.constant 0 : index
    %c0_13 = arith.constant 0 : index
    %16 = vector.load %arg3[%c0_11, %c0_12, %c0_13] : memref<1x1x256xf32, #tpu.memory_space<vmem>>, vector<1x1x256xf32>
    %17 = vector.shape_cast %16 : vector<1x1x256xf32> to vector<1x256xf32>
    %18 = arith.addf %17, %15 : vector<1x256xf32>
    %19 = vector.broadcast %9 : f32 to vector<1x256xf32>
    %20 = arith.mulf %19, %18 : vector<1x256xf32>
    %21 = vector.broadcast %11 : f32 to vector<1x256xf32>
    %22 = arith.addf %20, %21 : vector<1x256xf32>
    %23 = math.tanh %22 : vector<1x256xf32>
    %cst_14 = arith.constant 1.000000e+00 : f32
    %24 = vector.broadcast %cst_14 : f32 to vector<1x256xf32>
    %25 = arith.addf %23, %24 : vector<1x256xf32>
    %26 = vector.broadcast %7 : f32 to vector<1x256xf32>
    %27 = arith.mulf %26, %25 : vector<1x256xf32>
    %c0_15 = arith.constant 0 : index
    %c0_16 = arith.constant 0 : index
    %c0_17 = arith.constant 0 : index
    %28 = vector.load %arg4[%c0_15, %c0_16, %c0_17] : memref<2x1x256xf32, #tpu.memory_space<vmem>>, vector<1x1x256xf32>
    %29 = vector.shape_cast %28 : vector<1x1x256xf32> to vector<1x256xf32>
    %30 = vector.shape_cast %27 : vector<1x256xf32> to vector<1x1x256xf32>
    tpu.vector_store %arg4[%c0_15, %c0_16, %c0_17], %30 {strides = array<i32>} : memref<2x1x256xf32, #tpu.memory_space<vmem>>, vector<1x1x256xf32>,
    %31 = arith.addf %13, %17 : vector<1x256xf32>
    %32 = vector.broadcast %3 : f32 to vector<1x256xf32>
    %33 = arith.mulf %32, %31 : vector<1x256xf32>
    %34 = vector.broadcast %5 : f32 to vector<1x256xf32>
    %35 = arith.addf %33, %34 : vector<1x256xf32>
    %36 = math.tanh %35 : vector<1x256xf32>
    %cst_18 = arith.constant 1.000000e+00 : f32
    %37 = vector.broadcast %cst_18 : f32 to vector<1x256xf32>
    %38 = arith.addf %36, %37 : vector<1x256xf32>
    %39 = vector.broadcast %1 : f32 to vector<1x256xf32>
    %40 = arith.mulf %39, %38 : vector<1x256xf32>
    %c1_19 = arith.constant 1 : index
    %c0_20 = arith.constant 0 : index
    %c0_21 = arith.constant 0 : index
    %41 = vector.load %arg4[%c1_19, %c0_20, %c0_21] : memref<2x1x256xf32, #tpu.memory_space<vmem>>, vector<1x1x256xf32>
    %42 = vector.shape_cast %41 : vector<1x1x256xf32> to vector<1x256xf32>
    %43 = vector.shape_cast %40 : vector<1x256xf32> to vector<1x1x256xf32>
    tpu.vector_store %arg4[%c1_19, %c0_20, %c0_21], %43 {strides = array<i32>} : memref<2x1x256xf32, #tpu.memory_space<vmem>>, vector<1x1x256xf32>,
    return
  }
  func.func @transform_0(%arg0: i32) -> i32 {
    %c0_i32 = arith.constant 0 : i32
    %c0_i32_0 = arith.constant 0 : i32
    return %c0_i32 : i32
  }
  func.func @transform_1(%arg0: i32) -> (i32, i32, i32) {
    %c0_i32 = arith.constant 0 : i32
    %c0_i32_0 = arith.constant 0 : i32
    %c0_i32_1 = arith.constant 0 : i32
    return %c0_i32, %c0_i32_0, %arg0 : i32, i32, i32
  }
  func.func @transform_2(%arg0: i32) -> (i32, i32, i32) {
    %c0_i32 = arith.constant 0 : i32
    %c0_i32_0 = arith.constant 0 : i32
    %c0_i32_1 = arith.constant 0 : i32
    return %c0_i32, %c0_i32_0, %arg0 : i32, i32, i32
  }
  func.func @transform_3(%arg0: i32) -> (i32, i32, i32) {
    %c0_i32 = arith.constant 0 : i32
    %c0_i32_0 = arith.constant 0 : i32
    %c0_i32_1 = arith.constant 0 : i32
    return %c0_i32, %c0_i32_0, %arg0 : i32, i32, i32
  }
}

</mosaic_0001>

<llo_original>
// kernel: berrar_forward.1
$region0: #{berrar_forward.1}
  #allocation0 [shape = 'u32[]', space=smem, size = 0x4, offset = 0x4, fixed_abs, tag = 'smem constant byte address 0x4 - core index']
  #allocation1 [shape = 'u32[72,128]{1,0:T(1,128)}', space=vmem, size = 0x9000, scoped, tag = 'internal scratch']
  %s0 = inlined_call_operand.vmem [shape: f32[6], index: 0, kind: input, shape index: {}]
  %s1 = inlined_call_operand.vmem [shape: f32[2,1,256], index: 1, kind: input, shape index: {}]
  %s2 = inlined_call_operand.vmem [shape: f32[2,1,256], index: 2, kind: input, shape index: {}]
  %s3 = inlined_call_operand.vmem [shape: f32[2,1,256], index: 3, kind: output, shape index: {}]
  %s4 = sld [smem:[#allocation0]]
  $region26: #{berrar_forward.1} parent=0
    _
  %s6 = ssub.s32 1, %s4
  %s7 = scalar_select 0, %s6, %s4
  $region1: #{berrar_forward.1} parent=0
    #allocation2 [shape = 'u8[512]{0}', space=smem, size = 0x200, scoped, tag = 'input window, operand 0, single buffered']
    #allocation3 [shape = 's32[1]{0}', space=sflag, size = 0x4, scoped, tag = 'scoped memory for berrar_forward.1']
    %8 = vsyncpa [#allocation3], 0
    // Predicated region
    $region2: #{berrar_forward.1} parent=1 // pred_check
      _
    $region3: #{berrar_forward.1} parent=1 // pred_check_branch
      %10 = sbr.rel (0) target = $region5
    $region4: #{berrar_forward.1} parent=1 // pred_region
      %12 = vsyncadd [#allocation3], 0
      %s14 = sshll.u32 %s0, 4
      %s15 = int_to_ptr.vmem [resolvable:$true] %s14
      %17 = dma.vmem_to_smem %s15, 16, [#allocation2], [#allocation3]
    $region5: #{berrar_forward.1} parent=1 // pred_fallthru
      _
    // Predicated region
    $region6: #{berrar_forward.1} parent=1 // pred_check
      _
    $region7: #{berrar_forward.1} parent=1 // pred_check_branch
      %19 = sbr.rel (0) target = $region9
    $region8: #{berrar_forward.1} parent=1 // pred_region
      _
    $region9: #{berrar_forward.1} parent=1 // pred_fallthru
      _
    // Predicated region
    $region10: #{berrar_forward.1} parent=1 // pred_check
      _
    $region11: #{berrar_forward.1} parent=1 // pred_check_branch
      %21 = sbr.rel (0) target = $region13
    $region12: #{berrar_forward.1} parent=1 // pred_region
      _
    $region13: #{berrar_forward.1} parent=1 // pred_fallthru
      _
    // Predicated region
    $region14: #{berrar_forward.1} parent=1 // pred_check
      _
    $region15: #{berrar_forward.1} parent=1 // pred_check_branch
      %23 = sbr.rel (0) target = $region17
    $region16: #{berrar_forward.1} parent=1 // pred_region
      %25 = dma.done [#allocation3], 16
    $region17: #{berrar_forward.1} parent=1 // pred_fallthru
      _
    %26 = sfence
    %s27 = sld [smem:[#allocation2]]
    %s28 = smul.f32 %s27, 0.5
    %s29 = sld [smem:[#allocation2 + $0x1]]
    %s30 = smul.f32 %s29, 0.5
    %s31 = sld [smem:[#allocation2 + $0x2]]
    %s32 = smul.f32 %s31, 0.5
    %s33 = sld [smem:[#allocation2 + $0x3]]
    %s34 = smul.f32 %s33, 0.5
    %s35 = sld [smem:[#allocation2 + $0x4]]
    %s36 = smul.f32 %s35, 0.5
    %s37 = sld [smem:[#allocation2 + $0x5]]
    %s38 = smul.f32 %s37, 0.5
    %v39 = vld [vmem:[%s1] sm:$0x3]
    %s40 = scalar_lea.vmem %s1, 2
    %v41 = vld [vmem:[%s40] sm:$0x3]
    %v42 = vld [vmem:[%s2] sm:$0x3]
    %v43 = vadd.f32 %v42, %v41
    %v44 = vstv %s36
    %v45 = vmul.f32 %v44, %v43
    %v46 = vstv %s38
    %v47 = vadd.f32 %v45, %v46
    %v48 = vtanh.pop %v47
    %v49 = vadd.f32 %v48, 1.0
    %v50 = vstv %s34
    %v51 = vmul.f32 %v50, %v49
    %v52 = vlaneseq
    %vm53 = vcmp.ge.s32.totalorder %v52, 0
    %vm54 = vcmp.lt.s32.totalorder %v52, 256
    %vm55 = vmand %vm53, %vm54
    %56 = vst.msk [vmem:[%s3] sm:$0x3] %vm55, %v51
    %v57 = vadd.f32 %v39, %v42
    %v58 = vstv %s30
    %v59 = vmul.f32 %v58, %v57
    %v60 = vstv %s32
    %v61 = vadd.f32 %v59, %v60
    %v62 = vtanh.pop %v61
    %v63 = vadd.f32 %v62, 1.0
    %v64 = vstv %s28
    %v65 = vmul.f32 %v64, %v63
    %s66 = scalar_lea.vmem %s3, 2
    %67 = vst.msk [vmem:[%s66] sm:$0x3] %vm55, %v65
    // Predicated region
    $region18: #{berrar_forward.1} parent=1 // pred_check
      _
    $region19: #{berrar_forward.1} parent=1 // pred_check_branch
      %69 = sbr.rel (0) target = $region21
    $region20: #{berrar_forward.1} parent=1 // pred_region
      _
    $region21: #{berrar_forward.1} parent=1 // pred_fallthru
      _
    // Predicated region
    $region22: #{berrar_forward.1} parent=1 // pred_check
      _
    $region23: #{berrar_forward.1} parent=1 // pred_check_branch
      %71 = sbr.rel (0) target = $region25
    $region24: #{berrar_forward.1} parent=1 // pred_region
      _
    $region25: #{berrar_forward.1} parent=1 // pred_fallthru
      _
    %72 = vsyncpa [#allocation3], 1

</llo_original>
